<compile_context>
chip_gen: v7x
topology: tpu7x:2x2x1
jax: 0.10.0
libtpu: 0.0.40
codegen_flags: <defaults>
</compile_context>

<pallas_src>
import functools

import jax
import jax.numpy as jnp
from jax.experimental import pallas as pl
from jax.experimental.pallas import tpu as pltpu


def _round_up(x: int, m: int) -> int:
    return ((x + m - 1) // m) * m


def _macro_f1_kernel(labels_ref, outputs_ref, out_ref,
                     tp_ref, pc_ref, lc_ref, *, n_rows, tile_n):
    pid = pl.program_id(0)

    @pl.when(pid == 0)
    def _init():
        tp_ref[...] = jnp.zeros_like(tp_ref)
        pc_ref[...] = jnp.zeros_like(pc_ref)
        lc_ref[...] = jnp.zeros_like(lc_ref)

    outputs = outputs_ref[...]                 # (tile_n, C) native dtype (f32 / bf16)
    labels = labels_ref[...]                   # (tile_n, 1) int32
    tn, C = outputs.shape

    class_ids = jax.lax.broadcasted_iota(jnp.int32, (tn, C), 1)
    row_ids = jax.lax.broadcasted_iota(jnp.int32, (tn, 1), 0)
    # Mask rows beyond N (ragged last tile: OOB block rows hold garbage).
    row_valid = (pid * tile_n + row_ids) < n_rows          # (tile_n, 1) bool

    # argmax over the class (lane) axis, first index on ties -> torch.max(1).
    maxval = jnp.max(outputs, axis=1, keepdims=True)        # (tile_n, 1)
    cand = jnp.where(outputs == maxval, class_ids, C)
    preds = jnp.min(cand, axis=1, keepdims=True)             # (tile_n, 1)

    pred_oh = jnp.where(row_valid & (class_ids == preds), 1.0, 0.0).astype(jnp.float32)
    label_oh = jnp.where(row_valid & (class_ids == labels), 1.0, 0.0).astype(jnp.float32)

    # Only one (tile_n, C) product; fp/fn derived from counts at finalize.
    tp_ref[...] += jnp.sum(pred_oh * label_oh, axis=0, keepdims=True)   # (1, C)
    pc_ref[...] += jnp.sum(pred_oh, axis=0, keepdims=True)              # (1, C)
    lc_ref[...] += jnp.sum(label_oh, axis=0, keepdims=True)             # (1, C)

    @pl.when(pid == pl.num_programs(0) - 1)
    def _finalize():
        tp = tp_ref[...]
        pc = pc_ref[...]
        lc = lc_ref[...]
        fp = pc - tp
        fn = lc - tp
        denom = 2.0 * tp + fp + fn
        # Exact divide on the tiny (1, C) epilogue keeps 1e-6 parity with sklearn.
        f1 = jnp.where(denom > 0.0, 2.0 * tp / jnp.maximum(denom, 1.0), 0.0)
        # Classes present in y_true or y_pred:  pc + lc > 0  <=>  tp+fp+fn > 0.
        present = jnp.where(pc + lc > 0.0, 1.0, 0.0)
        n_present = jnp.sum(present, axis=1, keepdims=True)             # (1, 1)
        f1_sum = jnp.sum(f1, axis=1, keepdims=True)                     # (1, 1)
        out_ref[...] = f1_sum / jnp.maximum(n_present, 1.0)


def multiclass_f1_macro(labels, outputs, *, tile_n=512):
    """labels: (N,) int, outputs: (N, C) logits (any float dtype) -> scalar macro-F1 (f32).

    tile_n: rows per grid step.  512-1024 hits the measured HBM-roofline sweet
    spot on v6e; keep 2 inputs x 2 buffers x tile bytes under the scoped-VMEM
    budget on v7x (64 MiB physical / 32 MiB scoped default).
    """
    N, C = outputs.shape
    tile_n = max(8, min(int(tile_n), _round_up(N, 8)))
    tile_n = _round_up(tile_n, 8)
    grid = (pl.cdiv(N, tile_n),)

    labels2d = labels.astype(jnp.int32).reshape(N, 1)
    itemsize = jnp.dtype(outputs.dtype).itemsize

    # Raise the scoped-VMEM limit only if the double-buffered tiles need it.
    est_bytes = 2 * 2 * (tile_n * C * itemsize + tile_n * 4) + 3 * C * 4 + (1 << 20)
    vmem_limit = None
    if est_bytes > (24 << 20):
        vmem_limit = min(_round_up(est_bytes + (8 << 20), 1 << 20), 100 << 20)

    kernel = functools.partial(_macro_f1_kernel, n_rows=N, tile_n=tile_n)

    out = pl.pallas_call(
        kernel,
        out_shape=jax.ShapeDtypeStruct((1, 1), jnp.float32),
        grid_spec=pltpu.PrefetchScalarGridSpec(
            num_scalar_prefetch=0,
            grid=grid,
            in_specs=[
                pl.BlockSpec((tile_n, 1), lambda i: (i, 0)),   # labels
                pl.BlockSpec((tile_n, C), lambda i: (i, 0)),   # logits (native dtype)
            ],
            out_specs=pl.BlockSpec((1, 1), lambda i: (0, 0)),
            scratch_shapes=[
                pltpu.VMEM((1, C), jnp.float32),   # tp
                pltpu.VMEM((1, C), jnp.float32),   # pred_count
                pltpu.VMEM((1, C), jnp.float32),   # label_count
            ],
        ),
        compiler_params=pltpu.CompilerParams(
            dimension_semantics=("arbitrary",),    # reduction axis (resident output/scratch)
            vmem_limit_bytes=vmem_limit,
        ),
    )(labels2d, outputs)
    return out[0, 0]


def _reference_macro_f1(labels, outputs):
    """Pure-JAX reference mirroring sklearn f1_score(average='macro')."""
    preds = jnp.argmax(outputs, axis=1)
    C = outputs.shape[1]
    cls = jnp.arange(C)
    tp = jnp.sum((preds[:, None] == cls) & (labels[:, None] == cls), axis=0)
    fp = jnp.sum((preds[:, None] == cls) & (labels[:, None] != cls), axis=0)
    fn = jnp.sum((preds[:, None] != cls) & (labels[:, None] == cls), axis=0)
    denom = 2 * tp + fp + fn
    f1 = jnp.where(denom > 0, 2.0 * tp / jnp.maximum(denom, 1), 0.0)
    present = (tp + fp + fn) > 0
    return jnp.sum(f1) / jnp.maximum(jnp.sum(present), 1)


if __name__ == "__main__":
    key = jax.random.PRNGKey(0)
    k1, k2, k3, k4 = jax.random.split(key, 4)

    # Case 1: N multiple of tile_n -> exercises multi-step grid + accumulation.
    N1, C1 = 64, 8
    out1 = jax.random.normal(k1, (N1, C1), dtype=jnp.float32)
    lab1 = jax.random.randint(k2, (N1,), 0, C1, dtype=jnp.int32)
    r1 = multiclass_f1_macro(lab1, out1, tile_n=16)
    jax.block_until_ready(r1)
    ref1 = _reference_macro_f1(lab1, out1)
    assert jnp.allclose(r1, ref1, atol=1e-6), (r1, ref1)

    # Case 2: ragged last tile (N not a multiple of tile_n) -> exercises masking.
    N2, C2 = 60, 8
    out2 = jax.random.normal(k3, (N2, C2), dtype=jnp.float32)
    lab2 = jax.random.randint(k4, (N2,), 0, C2, dtype=jnp.int32)
    r2 = multiclass_f1_macro(lab2, out2, tile_n=16)
    jax.block_until_ready(r2)
    ref2 = _reference_macro_f1(lab2, out2)
    assert jnp.allclose(r2, ref2, atol=1e-6), (r2, ref2)

    # Case 3: bf16 logits streamed in native dtype (no wrapper f32 cast).
    out3 = out1.astype(jnp.bfloat16)
    r3 = multiclass_f1_macro(lab1, out3, tile_n=16)
    jax.block_until_ready(r3)
    ref3 = _reference_macro_f1(lab1, out3)
    assert jnp.allclose(r3, ref3, atol=1e-6), (r3, ref3)

    print("KERNEL_OK")
</pallas_src>

<mosaic_0001>
module attributes {stable_mosaic.version = 11 : i64} {
  func.func @_macro_f1_kernel(%arg0: i32, %arg1: memref<16x1xi32, #tpu.memory_space<vmem>>, %arg2: memref<16x8xf32, #tpu.memory_space<vmem>>, %arg3: memref<1x1xf32, #tpu.memory_space<vmem>>, %arg4: memref<1x8xf32, #tpu.memory_space<vmem>>, %arg5: memref<1x8xf32, #tpu.memory_space<vmem>>, %arg6: memref<1x8xf32, #tpu.memory_space<vmem>>) attributes {dimension_semantics = [#tpu.dimension_semantics<arbitrary>], iteration_bounds = array<i64: 4>, scalar_prefetch = 0 : i64, scratch_operands = 3 : i64, tpu.core_type = #tpu.core_type<tc>, window_params = [{transform_indices = @transform_0, window_bounds = array<i64: 16, 1>}, {transform_indices = @transform_1, window_bounds = array<i64: 16, 8>}, {pipeline_mode = #tpu.pipeline_mode<synchronous>, transform_indices = @transform_2, window_bounds = array<i64: 1, 1>}]} {
    %c0_i32 = arith.constant 0 : i32
    %0 = arith.cmpi eq, %arg0, %c0_i32 : i32
    %1 = arith.extui %0 : i1 to i32
    %c0_i32_0 = arith.constant 0 : i32
    %2 = arith.cmpi ne, %1, %c0_i32_0 : i32
    scf.if %2 {
      %cst_25 = arith.constant 0.000000e+00 : f32
      %53 = vector.broadcast %cst_25 : f32 to vector<1x8xf32>
      %c0_26 = arith.constant 0 : index
      %c0_27 = arith.constant 0 : index
      %54 = vector.load %arg4[%c0_26, %c0_27] : memref<1x8xf32, #tpu.memory_space<vmem>>, vector<1x8xf32>
      tpu.vector_store %arg4[%c0_26, %c0_27], %53 {strides = array<i32>} : memref<1x8xf32, #tpu.memory_space<vmem>>, vector<1x8xf32>,
      %cst_28 = arith.constant 0.000000e+00 : f32
      %55 = vector.broadcast %cst_28 : f32 to vector<1x8xf32>
      %c0_29 = arith.constant 0 : index
      %c0_30 = arith.constant 0 : index
      %56 = vector.load %arg5[%c0_29, %c0_30] : memref<1x8xf32, #tpu.memory_space<vmem>>, vector<1x8xf32>
      tpu.vector_store %arg5[%c0_29, %c0_30], %55 {strides = array<i32>} : memref<1x8xf32, #tpu.memory_space<vmem>>, vector<1x8xf32>,
      %cst_31 = arith.constant 0.000000e+00 : f32
      %57 = vector.broadcast %cst_31 : f32 to vector<1x8xf32>
      %c0_32 = arith.constant 0 : index
      %c0_33 = arith.constant 0 : index
      %58 = vector.load %arg6[%c0_32, %c0_33] : memref<1x8xf32, #tpu.memory_space<vmem>>, vector<1x8xf32>
      tpu.vector_store %arg6[%c0_32, %c0_33], %57 {strides = array<i32>} : memref<1x8xf32, #tpu.memory_space<vmem>>, vector<1x8xf32>,
    } else {
    }
    %c0 = arith.constant 0 : index
    %c0_1 = arith.constant 0 : index
    %3 = vector.load %arg2[%c0, %c0_1] : memref<16x8xf32, #tpu.memory_space<vmem>>, vector<16x8xf32>
    %c0_2 = arith.constant 0 : index
    %c0_3 = arith.constant 0 : index
    %4 = vector.load %arg1[%c0_2, %c0_3] : memref<16x1xi32, #tpu.memory_space<vmem>>, vector<16x1xi32>
    %5 = tpu.iota {dimensions = array<i32: 1>} : vector<16x8xi32>
    %6 = tpu.iota {dimensions = array<i32: 0>} : vector<16x1xi32>
    %c16_i32 = arith.constant 16 : i32
    %7 = arith.muli %arg0, %c16_i32 : i32
    %8 = vector.broadcast %7 : i32 to vector<16x1xi32>
    %9 = arith.addi %8, %6 : vector<16x1xi32>
    %c64_i32 = arith.constant 64 : i32
    %10 = vector.broadcast %c64_i32 : i32 to vector<16x1xi32>
    %11 = arith.cmpi slt, %9, %10 : vector<16x1xi32>
    %cst = arith.constant dense<0xFF800000> : vector<16xf32>
    %12 = vector.multi_reduction <maximumf>, %3, %cst [1] : vector<16x8xf32> to vector<16xf32>
    %13 = vector.shape_cast %12 : vector<16xf32> to vector<16x1xf32>
    %14 = vector.broadcast %13 : vector<16x1xf32> to vector<16x8xf32>
    %15 = arith.cmpf oeq, %3, %14 : vector<16x8xf32>
    %c8_i32 = arith.constant 8 : i32
    %16 = vector.broadcast %c8_i32 : i32 to vector<16x8xi32>
    %17 = arith.select %15, %5, %16 : vector<16x8xi1>, vector<16x8xi32>
    %cst_4 = arith.constant dense<2147483647> : vector<16xi32>
    %18 = vector.multi_reduction <minsi>, %17, %cst_4 [1] : vector<16x8xi32> to vector<16xi32>
    %19 = vector.shape_cast %18 : vector<16xi32> to vector<16x1xi32>
    %20 = vector.broadcast %19 : vector<16x1xi32> to vector<16x8xi32>
    %21 = arith.cmpi eq, %5, %20 : vector<16x8xi32>
    %22 = vector.broadcast %11 : vector<16x1xi1> to vector<16x8xi1>
    %23 = arith.andi %22, %21 : vector<16x8xi1>
    %cst_5 = arith.constant 1.000000e+00 : f32
    %cst_6 = arith.constant 0.000000e+00 : f32
    %24 = vector.broadcast %cst_5 : f32 to vector<16x8xf32>
    %25 = vector.broadcast %cst_6 : f32 to vector<16x8xf32>
    %26 = arith.select %23, %24, %25 : vector<16x8xi1>, vector<16x8xf32>
    %27 = vector.broadcast %4 : vector<16x1xi32> to vector<16x8xi32>
    %28 = arith.cmpi eq, %5, %27 : vector<16x8xi32>
    %29 = vector.broadcast %11 : vector<16x1xi1> to vector<16x8xi1>
    %30 = arith.andi %29, %28 : vector<16x8xi1>
    %cst_7 = arith.constant 1.000000e+00 : f32
    %cst_8 = arith.constant 0.000000e+00 : f32
    %31 = vector.broadcast %cst_7 : f32 to vector<16x8xf32>
    %32 = vector.broadcast %cst_8 : f32 to vector<16x8xf32>
    %33 = arith.select %30, %31, %32 : vector<16x8xi1>, vector<16x8xf32>
    %c0_9 = arith.constant 0 : index
    %c0_10 = arith.constant 0 : index
    %34 = vector.load %arg4[%c0_9, %c0_10] : memref<1x8xf32, #tpu.memory_space<vmem>>, vector<1x8xf32>
    %35 = arith.mulf %26, %33 : vector<16x8xf32>
    %cst_11 = arith.constant dense<0.000000e+00> : vector<8xf32>
    %36 = vector.multi_reduction <add>, %35, %cst_11 [0] : vector<16x8xf32> to vector<8xf32>
    %37 = vector.shape_cast %36 : vector<8xf32> to vector<1x8xf32>
    %38 = arith.addf %34, %37 : vector<1x8xf32>
    %c0_12 = arith.constant 0 : index
    %c0_13 = arith.constant 0 : index
    %39 = vector.load %arg4[%c0_12, %c0_13] : memref<1x8xf32, #tpu.memory_space<vmem>>, vector<1x8xf32>
    tpu.vector_store %arg4[%c0_12, %c0_13], %38 {strides = array<i32>} : memref<1x8xf32, #tpu.memory_space<vmem>>, vector<1x8xf32>,
    %c0_14 = arith.constant 0 : index
    %c0_15 = arith.constant 0 : index
    %40 = vector.load %arg5[%c0_14, %c0_15] : memref<1x8xf32, #tpu.memory_space<vmem>>, vector<1x8xf32>
    %cst_16 = arith.constant dense<0.000000e+00> : vector<8xf32>
    %41 = vector.multi_reduction <add>, %26, %cst_16 [0] : vector<16x8xf32> to vector<8xf32>
    %42 = vector.shape_cast %41 : vector<8xf32> to vector<1x8xf32>
    %43 = arith.addf %40, %42 : vector<1x8xf32>
    %c0_17 = arith.constant 0 : index
    %c0_18 = arith.constant 0 : index
    %44 = vector.load %arg5[%c0_17, %c0_18] : memref<1x8xf32, #tpu.memory_space<vmem>>, vector<1x8xf32>
    tpu.vector_store %arg5[%c0_17, %c0_18], %43 {strides = array<i32>} : memref<1x8xf32, #tpu.memory_space<vmem>>, vector<1x8xf32>,
    %c0_19 = arith.constant 0 : index
    %c0_20 = arith.constant 0 : index
    %45 = vector.load %arg6[%c0_19, %c0_20] : memref<1x8xf32, #tpu.memory_space<vmem>>, vector<1x8xf32>
    %cst_21 = arith.constant dense<0.000000e+00> : vector<8xf32>
    %46 = vector.multi_reduction <add>, %33, %cst_21 [0] : vector<16x8xf32> to vector<8xf32>
    %47 = vector.shape_cast %46 : vector<8xf32> to vector<1x8xf32>
    %48 = arith.addf %45, %47 : vector<1x8xf32>
    %c0_22 = arith.constant 0 : index
    %c0_23 = arith.constant 0 : index
    %49 = vector.load %arg6[%c0_22, %c0_23] : memref<1x8xf32, #tpu.memory_space<vmem>>, vector<1x8xf32>
    tpu.vector_store %arg6[%c0_22, %c0_23], %48 {strides = array<i32>} : memref<1x8xf32, #tpu.memory_space<vmem>>, vector<1x8xf32>,
    %c3_i32 = arith.constant 3 : i32
    %50 = arith.cmpi eq, %arg0, %c3_i32 : i32
    %51 = arith.extui %50 : i1 to i32
    %c0_i32_24 = arith.constant 0 : i32
    %52 = arith.cmpi ne, %51, %c0_i32_24 : i32
    scf.if %52 {
      %c0_25 = arith.constant 0 : index
      %c0_26 = arith.constant 0 : index
      %53 = vector.load %arg4[%c0_25, %c0_26] : memref<1x8xf32, #tpu.memory_space<vmem>>, vector<1x8xf32>
      %c0_27 = arith.constant 0 : index
      %c0_28 = arith.constant 0 : index
      %54 = vector.load %arg5[%c0_27, %c0_28] : memref<1x8xf32, #tpu.memory_space<vmem>>, vector<1x8xf32>
      %c0_29 = arith.constant 0 : index
      %c0_30 = arith.constant 0 : index
      %55 = vector.load %arg6[%c0_29, %c0_30] : memref<1x8xf32, #tpu.memory_space<vmem>>, vector<1x8xf32>
      %56 = arith.subf %54, %53 : vector<1x8xf32>
      %57 = arith.subf %55, %53 : vector<1x8xf32>
      %cst_31 = arith.constant 2.000000e+00 : f32
      %58 = vector.broadcast %cst_31 : f32 to vector<1x8xf32>
      %59 = arith.mulf %58, %53 : vector<1x8xf32>
      %60 = arith.addf %59, %56 : vector<1x8xf32>
      %61 = arith.addf %60, %57 : vector<1x8xf32>
      %cst_32 = arith.constant 0.000000e+00 : f32
      %62 = vector.broadcast %cst_32 : f32 to vector<1x8xf32>
      %63 = arith.cmpf ogt, %61, %62 : vector<1x8xf32>
      %cst_33 = arith.constant 2.000000e+00 : f32
      %64 = vector.broadcast %cst_33 : f32 to vector<1x8xf32>
      %65 = arith.mulf %64, %53 : vector<1x8xf32>
      %cst_34 = arith.constant 1.000000e+00 : f32
      %66 = vector.broadcast %cst_34 : f32 to vector<1x8xf32>
      %67 = arith.maximumf %61, %66 : vector<1x8xf32>
      %68 = arith.divf %65, %67 : vector<1x8xf32>
      %cst_35 = arith.constant 0.000000e+00 : f32
      %69 = vector.broadcast %cst_35 : f32 to vector<1x8xf32>
      %70 = arith.select %63, %68, %69 : vector<1x8xi1>, vector<1x8xf32>
      %71 = arith.addf %54, %55 : vector<1x8xf32>
      %cst_36 = arith.constant 0.000000e+00 : f32
      %72 = vector.broadcast %cst_36 : f32 to vector<1x8xf32>
      %73 = arith.cmpf ogt, %71, %72 : vector<1x8xf32>
      %cst_37 = arith.constant 1.000000e+00 : f32
      %cst_38 = arith.constant 0.000000e+00 : f32
      %74 = vector.broadcast %cst_37 : f32 to vector<1x8xf32>
      %75 = vector.broadcast %cst_38 : f32 to vector<1x8xf32>
      %76 = arith.select %73, %74, %75 : vector<1x8xi1>, vector<1x8xf32>
      %cst_39 = arith.constant dense<0.000000e+00> : vector<1xf32>
      %77 = vector.multi_reduction <add>, %76, %cst_39 [1] : vector<1x8xf32> to vector<1xf32>
      %78 = vector.shape_cast %77 : vector<1xf32> to vector<1x1xf32>
      %cst_40 = arith.constant dense<0.000000e+00> : vector<1xf32>
      %79 = vector.multi_reduction <add>, %70, %cst_40 [1] : vector<1x8xf32> to vector<1xf32>
      %80 = vector.shape_cast %79 : vector<1xf32> to vector<1x1xf32>
      %cst_41 = arith.constant 1.000000e+00 : f32
      %81 = vector.broadcast %cst_41 : f32 to vector<1x1xf32>
      %82 = arith.maximumf %78, %81 : vector<1x1xf32>
      %83 = arith.divf %80, %82 : vector<1x1xf32>
      %c0_42 = arith.constant 0 : index
      %c0_43 = arith.constant 0 : index
      %84 = vector.load %arg3[%c0_42, %c0_43] : memref<1x1xf32, #tpu.memory_space<vmem>>, vector<1x1xf32>
      tpu.vector_store %arg3[%c0_42, %c0_43], %83 {strides = array<i32>} : memref<1x1xf32, #tpu.memory_space<vmem>>, vector<1x1xf32>,
    } else {
    }
    return
  }
  func.func @transform_0(%arg0: i32) -> (i32, i32) {
    %c0_i32 = arith.constant 0 : i32
    %c0_i32_0 = arith.constant 0 : i32
    return %arg0, %c0_i32 : i32, i32
  }
  func.func @transform_1(%arg0: i32) -> (i32, i32) {
    %c0_i32 = arith.constant 0 : i32
    %c0_i32_0 = arith.constant 0 : i32
    return %arg0, %c0_i32 : i32, i32
  }
  func.func @transform_2(%arg0: i32) -> (i32, i32) {
    %c0_i32 = arith.constant 0 : i32
    %c0_i32_0 = arith.constant 0 : i32
    %c0_i32_1 = arith.constant 0 : i32
    return %c0_i32, %c0_i32_0 : i32, i32
  }
}

</mosaic_0001>

<llo_original>
// kernel: tpu_custom_call.1
$region0: #{tpu_custom_call.1}
  #allocation0 [shape = 'u32[]', space=smem, size = 0x4, offset = 0x4, fixed_abs, tag = 'smem constant byte address 0x4 - core index']
  #allocation1 [shape = 'u32[144,128]{1,0:T(1,128)}', space=vmem, size = 0x12000, scoped, tag = 'internal scratch']
  #allocation2 [shape = 'f32[1,8]{1,0:T(1,128)}', space=vmem, size = 0x200, scoped, tag = 'scratch operand']
  #allocation3 [shape = 'f32[1,8]{1,0:T(1,128)}', space=vmem, size = 0x200, scoped, tag = 'scratch operand']
  #allocation4 [shape = 'f32[1,8]{1,0:T(1,128)}', space=vmem, size = 0x200, scoped, tag = 'scratch operand']
  %s0 = inlined_call_operand.vmem [shape: s32[64,1], index: 0, kind: input, shape index: {}]
  %s1 = inlined_call_operand.vmem [shape: f32[64,8], index: 1, kind: input, shape index: {}]
  %s2 = inlined_call_operand.hbm [shape: f32[1,1], index: 2, kind: output, shape index: {}]
  %s3 = sld [smem:[#allocation0]]
  $region49: #{tpu_custom_call.1} parent=0
    _
  %s5 = ssub.s32 1, %s3
  %s6 = scalar_select 0, %s5, %s3
  $region1: #{tpu_custom_call.1} parent=0
    #allocation5 [shape = 'u8[512]{0}', space=vmem, size = 0x400, scoped, tag = 'output window, operand 0, single buffered']
    #allocation6 [shape = 's32[2]{0}', space=sflag, size = 0x8, scoped, tag = 'scoped memory for tpu_custom_call.1']
    %7 = vsyncpa [#allocation6], 0
    loop: start=0, step=1, limit=6
    $region2: #{tpu_custom_call.1} parent=1 // loop_pre_header
      _
    $region3: #{tpu_custom_call.1} parent=1 // loop_header
      %s9 = sphi 0, %s13
      %p10 = scmp.ge.s32.totalorder %s9, 6
      %s19 = sphi 0, %s21
      %s22 = sphi 0, %s19
      %s23 = sphi 0, %s22
      %s39 = sphi 0, %s23
      %s45 = sphi 0, %s47
      %s48 = sphi 0, %s45
      %s49 = sphi 0, %s48
      %s65 = sphi 0, %s49
      %s69 = sphi 0, %s69
      %s71 = sphi 0, %s69
      %s72 = sphi 0, %s71
      %s86 = sphi 0, %s72
    $region4: #{tpu_custom_call.1} parent=1 // loop_header_branch
      %12 = sbr.rel (%p10) target = $region8
    $region5: #{tpu_custom_call.1} parent=1 // loop_body
      %s14 = ssub.s32 %s9, 1
      %s15 = ssub.s32 %s9, 2
      %s16 = sadd.s32 %s9, 1
      %s17 = ssub.s32 %s9, %s16
      %p18 = scmp.eq.s32.totalorder %s17, 0
      %s20 = sadd.s32 %s19, 1
      %s21 = scalar_select %p18, %s19, %s20
      %p24 = pneg %p18
      %p25 = scmp.eq.s32.totalorder %s9, 3
      %p26 = por %p24, %p25
      %p27 = scmp.ne.s32.totalorder %s19, %s22
      %p28 = scmp.eq.s32.totalorder %s9, 0
      %p29 = por %p27, %p28
      %p30 = scmp.ne.s32.totalorder %s19, %s22
      %p31 = scmp.eq.s32.totalorder %s14, 3
      %p32 = por %p30, %p31
      %p33 = scmp.ne.s32.totalorder %s22, %s23
      %p34 = scmp.eq.s32.totalorder %s14, 0
      %p35 = por %p33, %p34
      %p36 = scmp.ne.s32.totalorder %s22, %s23
      %p37 = scmp.eq.s32.totalorder %s15, 3
      %p38 = por %p36, %p37
      %p40 = scmp.ne.s32.totalorder %s23, %s39
      %p41 = scmp.eq.s32.totalorder %s15, 0
      %p42 = por %p40, %p41
      %s43 = ssub.s32 %s9, %s16
      %p44 = scmp.eq.s32.totalorder %s43, 0
      %s46 = sadd.s32 %s45, 1
      %s47 = scalar_select %p44, %s45, %s46
      %p50 = pneg %p44
      %p51 = scmp.eq.s32.totalorder %s9, 3
      %p52 = por %p50, %p51
      %p53 = scmp.ne.s32.totalorder %s45, %s48
      %p54 = scmp.eq.s32.totalorder %s9, 0
      %p55 = por %p53, %p54
      %p56 = scmp.ne.s32.totalorder %s45, %s48
      %p57 = scmp.eq.s32.totalorder %s14, 3
      %p58 = por %p56, %p57
      %p59 = scmp.ne.s32.totalorder %s48, %s49
      %p60 = scmp.eq.s32.totalorder %s14, 0
      %p61 = por %p59, %p60
      %p62 = scmp.ne.s32.totalorder %s48, %s49
      %p63 = scmp.eq.s32.totalorder %s15, 3
      %p64 = por %p62, %p63
      %p66 = scmp.ne.s32.totalorder %s49, %s65
      %p67 = scmp.eq.s32.totalorder %s15, 0
      %p68 = por %p66, %p67
      %s70 = sadd.s32 %s69, 1
      %p73 = scmp.eq.s32.totalorder %s9, 3
      %p74 = scmp.ne.s32.totalorder %s69, %s71
      %p75 = scmp.eq.s32.totalorder %s9, 0
      %p76 = por %p74, %p75
      %p77 = scmp.ne.s32.totalorder %s69, %s71
      %p78 = scmp.eq.s32.totalorder %s14, 3
      %p79 = por %p77, %p78
      %p80 = scmp.ne.s32.totalorder %s71, %s72
      %p81 = scmp.eq.s32.totalorder %s14, 0
      %p82 = por %p80, %p81
      %p83 = scmp.ne.s32.totalorder %s71, %s72
      %p84 = scmp.eq.s32.totalorder %s15, 3
      %p85 = por %p83, %p84
      %p87 = scmp.ne.s32.totalorder %s72, %s86
      %p88 = scmp.eq.s32.totalorder %s15, 0
      %p89 = por %p87, %p88
      %p90 = scmp.le.s32.totalorder 1, %s9
      %p91 = scmp.lt.s32.totalorder %s9, 5
      %p92 = pnand %p90, %p91
      %p93 = pneg %p92
      // Predicated region
      $region9: #{tpu_custom_call.1} parent=5 // pred_check
        _
      $region10: #{tpu_custom_call.1} parent=5 // pred_check_branch
        %95 = sbr.rel (%p92) target = $region12
      $region11: #{tpu_custom_call.1} parent=5 // pred_region
        %s96 = ssub.s32 %s9, 1
      $region12: #{tpu_custom_call.1} parent=5 // pred_fallthru
        _
      %p97 = scmp.lt.s32.totalorder %s9, 4
      // Predicated region
      $region13: #{tpu_custom_call.1} parent=5 // pred_check
        %p98 = pneg %p97
      $region14: #{tpu_custom_call.1} parent=5 // pred_check_branch
        %100 = sbr.rel (%p98) target = $region16
      $region15: #{tpu_custom_call.1} parent=5 // pred_region
        // Predicated region
        $region17: #{tpu_custom_call.1} parent=15 // pred_check
          %p101 = pneg %p29
        $region18: #{tpu_custom_call.1} parent=15 // pred_check_branch
          %103 = sbr.rel (%p101) target = $region20
        $region19: #{tpu_custom_call.1} parent=15 // pred_region
          %s104 = smul.u32 2, %s9
          %p105 = scmp.lt.s32.totalorder %s104, 7
          %s106 = scalar_select %p105, %s104, 7
          %s107 = smul.addr %s106, 8
          %s108 = scalar_lea.vmem %s0, %s107
          %s109 = smul.u32 2, %s9
        $region20: #{tpu_custom_call.1} parent=15 // pred_fallthru
          _
        // Predicated region
        $region21: #{tpu_custom_call.1} parent=15 // pred_check
          %p110 = pneg %p55
        $region22: #{tpu_custom_call.1} parent=15 // pred_check_branch
          %112 = sbr.rel (%p110) target = $region24
        $region23: #{tpu_custom_call.1} parent=15 // pred_region
          %s113 = smul.u32 2, %s9
          %p114 = scmp.lt.s32.totalorder %s113, 7
          %s115 = scalar_select %p114, %s113, 7
          %s116 = smul.addr %s115, 8
          %s117 = scalar_lea.vmem %s1, %s116
          %s118 = smul.u32 2, %s9
        $region24: #{tpu_custom_call.1} parent=15 // pred_fallthru
          _
      $region16: #{tpu_custom_call.1} parent=5 // pred_fallthru
        _
      %p119 = scmp.le.s32.totalorder 1, %s9
      %p120 = scmp.lt.s32.totalorder %s9, 5
      %p121 = pnand %p119, %p120
      %p122 = pneg %p121
      // Predicated region
      $region25: #{tpu_custom_call.1} parent=5 // pred_check
        _
      $region26: #{tpu_custom_call.1} parent=5 // pred_check_branch
        %124 = sbr.rel (%p121) target = $region28
      $region27: #{tpu_custom_call.1} parent=5 // pred_region
        %s125 = ssub.s32 %s9, 1
        %s126 = smul.u32 2, %s14
        %p127 = scmp.lt.s32.totalorder %s126, 7
        %s128 = scalar_select %p127, %s126, 7
        %s129 = smul.addr %s128, 8
        %s130 = scalar_lea.vmem %s0, %s129
        %p131 = pneg %p35
        %p132 = pneg %p32
        %s133 = smul.u32 2, %s14
        %p134 = scmp.lt.s32.totalorder %s133, 7
        %s135 = scalar_select %p134, %s133, 7
        %s136 = smul.addr %s135, 8
        %s137 = scalar_lea.vmem %s1, %s136
        %p138 = pneg %p61
        %p139 = pneg %p58
        %p140 = pneg %p82
        %p141 = pneg %p79
        %s142 = smul.u32 2, %s14
        %p143 = scmp.lt.s32.totalorder %s142, 7
        %s144 = scalar_select %p143, %s142, 7
        %s145 = smul.addr %s144, 8
        %s146 = scalar_lea.vmem %s0, %s145
        %s147 = smul.u32 2, %s14
        %s148 = smul.u32 2, %s14
        %p149 = scmp.lt.s32.totalorder %s148, 7
        %s150 = scalar_select %p149, %s148, 7
        %s151 = smul.addr %s150, 8
        %s152 = scalar_lea.vmem %s1, %s151
        %s153 = smul.u32 2, %s14
        %p154 = scmp.eq.s32.totalorder %s14, 0
        // Predicated region
        $region29: #{tpu_custom_call.1} parent=27 // pred_check
          %p155 = pneg %p154
        $region30: #{tpu_custom_call.1} parent=27 // pred_check_branch
          %157 = sbr.rel (%p155) target = $region32
        $region31: #{tpu_custom_call.1} parent=27 // pred_region
          %vm158 = vcmask 57344
          %159 = vst.msk [vmem:[#allocation2] sm:$0x1] %vm158, 0.0
          %160 = vst.msk [vmem:[#allocation3] sm:$0x1] %vm158, 0.0
          %161 = vst.msk [vmem:[#allocation4] sm:$0x1] %vm158, 0.0
        $region32: #{tpu_custom_call.1} parent=27 // pred_fallthru
          _
        %v162 = vld [vmem:[%s152] sm:$0xff]
        %v163 = vld [vmem:[%s152 + $0x8] sm:$0xff]
        %v164 = vld [vmem:[%s146] sm:$0xff]
        %v165 = vld [vmem:[%s146 + $0x8] sm:$0xff]
        %v166 = vlaneseq
        %v167 = vand.u32 %v166, 127
        %v168 = vlaneseq
        %v169 = vshrl.u32 %v168, 7
        %v170 = vadd.s32 %v169, 8
        %s171 = smul.u32 %s14, 16
        %v172 = vstv %s171
        %v173 = vadd.s32 %v172, %v169
        %v174 = vadd.s32 %v172, %v170
        %vm175 = vcmp.lt.s32.totalorder %v173, 64
        %vm176 = vcmp.lt.s32.totalorder %v174, 64
        %vm177 = vcmask 64512
        %v178 = vsel %vm177, %v162, -inf
        %179 = vmax.xlane.f32.xlu0 %v178
        %v180 = vpop.xlane.xlu0 %179
        %v181 = vsel %vm177, %v163, -inf
        %182 = vmax.xlane.f32.xlu0 %v181
        %v183 = vpop.xlane.xlu0 %182
        %vm184 = vcmp.eq.f32.partialorder %v162, %v180
        %vm185 = vcmp.eq.f32.partialorder %v163, %v183
        %v186 = vsel %vm184, %v167, 8
        %v187 = vsel %vm185, %v167, 8
        %v188 = vsel %vm177, %v186, 2147483647
        %v189 = vand.u32 %v188, 65535
        %v190 = vshra.s32 %v188, 16
        %v191 = vcvt.s32.f32 %v189
        %v192 = vcvt.s32.f32 %v190
        %193 = vmin.xlane.f32.xlu0 %v192
        %v194 = vpop.xlane.xlu0 %193
        %vm195 = vcmp.eq.f32.partialorder %v192, %v194
        %v196 = vsel %vm195, %v191, inf
        %197 = vmin.xlane.f32.xlu0 %v196
        %v198 = vpop.xlane.xlu0 %197
        %v199 = vcvt.f32.s32 %v198
        %v200 = vcvt.f32.s32 %v194
        %v201 = vshll.u32 %v200, 16
        %v202 = vadd.s32 %v201, %v199
        %v203 = vsel %vm177, %v187, 2147483647
        %v204 = vand.u32 %v203, 65535
        %v205 = vshra.s32 %v203, 16
        %v206 = vcvt.s32.f32 %v204
        %v207 = vcvt.s32.f32 %v205
        %208 = vmin.xlane.f32.xlu0 %v207
        %v209 = vpop.xlane.xlu0 %208
        %vm210 = vcmp.eq.f32.partialorder %v207, %v209
        %v211 = vsel %vm210, %v206, inf
        %212 = vmin.xlane.f32.xlu0 %v211
        %v213 = vpop.xlane.xlu0 %212
        %v214 = vcvt.f32.s32 %v213
        %v215 = vcvt.f32.s32 %v209
        %v216 = vshll.u32 %v215, 16
        %v217 = vadd.s32 %v216, %v214
        %vm218 = vcmp.eq.s32.totalorder %v167, %v202
        %vm219 = vcmp.eq.s32.totalorder %v167, %v217
        %v220 = vsel %vm175, 1, 0
        %v221 = vsel %vm176, 1, 0
        %vm222 = vcmp.eq.s32.totalorder %v220, 1
        %vm223 = vcmp.eq.s32.totalorder %v221, 1
        %vm224 = vmand %vm222, %vm218
        %vm225 = vmand %vm223, %vm219
        %v226 = vsel %vm224, 1.0, 0.0
        %v227 = vsel %vm225, 1.0, 0.0
        %228 = vset.pattern.permute.xlu0 0
        %229 = vperm.xlu0 %228, %v164
        %v230 = vpop.permute.xlu0 %229
        %231 = vset.pattern.permute.xlu0 0
        %232 = vperm.xlu0 %231, %v165
        %v233 = vpop.permute.xlu0 %232
        %vm234 = vcmp.eq.s32.totalorder %v167, %v230
        %vm235 = vcmp.eq.s32.totalorder %v167, %v233
        %vm236 = vmand %vm222, %vm234
        %vm237 = vmand %vm223, %vm235
        %v238 = vsel %vm236, 1.0, 0.0
        %v239 = vsel %vm237, 1.0, 0.0
        %v240 = vld [vmem:[#allocation2] sm:$0x1]
        %v241 = vmul.f32 %v226, %v238
        %v242 = vmul.f32 %v227, %v239
        %v243 = vsel %vm177, %v241, 0.0
        %v244 = vsel %vm177, %v242, 0.0
        %v245 = vadd.f32 %v243, %v244
        %v246 = vrot.slane %v245, 4
        %v247 = vadd.f32 %v245, %v246
        %v248 = vrot.slane %v247, 2
        %v249 = vadd.f32 %v247, %v248
        %v250 = vrot.slane %v249, 1
        %v251 = vadd.f32 %v249, %v250
        %v252 = vadd.f32 %v240, %v251
        %vm253 = vcmask 57344
        %254 = vst.msk [vmem:[#allocation2] sm:$0x1] %vm253, %v252
        %v255 = vld [vmem:[#allocation3] sm:$0x1]
        %v256 = vsel %vm177, %v226, 0.0
        %v257 = vsel %vm177, %v227, 0.0
        %v258 = vadd.f32 %v256, %v257
        %v259 = vrot.slane %v258, 4
        %v260 = vadd.f32 %v258, %v259
        %v261 = vrot.slane %v260, 2
        %v262 = vadd.f32 %v260, %v261
        %v263 = vrot.slane %v262, 1
        %v264 = vadd.f32 %v262, %v263
        %v265 = vadd.f32 %v255, %v264
        %266 = vst.msk [vmem:[#allocation3] sm:$0x1] %vm253, %v265
        %v267 = vld [vmem:[#allocation4] sm:$0x1]
        %v268 = vsel %vm177, %v238, 0.0
        %v269 = vsel %vm177, %v239, 0.0
        %v270 = vadd.f32 %v268, %v269
        %v271 = vrot.slane %v270, 4
        %v272 = vadd.f32 %v270, %v271
        %v273 = vrot.slane %v272, 2
        %v274 = vadd.f32 %v272, %v273
        %v275 = vrot.slane %v274, 1
        %v276 = vadd.f32 %v274, %v275
        %v277 = vadd.f32 %v267, %v276
        %278 = vst.msk [vmem:[#allocation4] sm:$0x1] %vm253, %v277
        %p279 = scmp.eq.s32.totalorder %s14, 3
        // Predicated region
        $region33: #{tpu_custom_call.1} parent=27 // pred_check
          %p280 = pneg %p279
        $region34: #{tpu_custom_call.1} parent=27 // pred_check_branch
          %282 = sbr.rel (%p280) target = $region36
        $region35: #{tpu_custom_call.1} parent=27 // pred_region
          %v283 = vld [vmem:[#allocation2] sm:$0x1]
          %v284 = vld [vmem:[#allocation3] sm:$0x1]
          %v285 = vld [vmem:[#allocation4] sm:$0x1]
          %v286 = vsub.f32 %v284, %v283
          %v287 = vsub.f32 %v285, %v283
          %v288 = vmul.f32 %v283, 2.0
          %v289 = vadd.f32 %v288, %v286
          %v290 = vadd.f32 %v289, %v287
          %vm291 = vcmp.gt.f32.partialorder %v290, 0.0
          %v292 = vmax.f32 %v290, 1.0
          %v293 = vrcp.pop %v292
          %v294 = vmul.f32 %v288, %v293
          %v295 = vsel %vm291, %v294, 0.0
          %v296 = vadd.f32 %v284, %v285
          %vm297 = vcmp.gt.f32.partialorder %v296, 0.0
          %v298 = vsel %vm297, 1.0, 0.0
          %v299 = vsel %vm253, %v298, 0.0
          %300 = vadd.xlane.f32.xlu0 %v299
          %v301 = vpop.xlane.xlu0 %300
          %v302 = vsel %vm253, %v295, 0.0
          %303 = vadd.xlane.f32.xlu0 %v302
          %v304 = vpop.xlane.xlu0 %303
          %v305 = vmax.f32 %v301, 1.0
          %v306 = vrcp.pop %v305
          %v307 = vmul.f32 %v304, %v306
          %vm308 = vcmask 0
          %309 = vst.msk [vmem:[#allocation5] sm:$0x1] %vm308, %v307
        $region36: #{tpu_custom_call.1} parent=27 // pred_fallthru
          _
        // Predicated region
        $region37: #{tpu_custom_call.1} parent=27 // pred_check
          %p310 = pneg %p79
        $region38: #{tpu_custom_call.1} parent=27 // pred_check_branch
          %312 = sbr.rel (%p310) target = $region40
        $region39: #{tpu_custom_call.1} parent=27 // pred_region
          %s314 = ssub.s32 16, 16
          %315 = vsyncadd [#allocation6], %s314
          %s317 = sshll.u32 [#allocation5], 4
          %s318 = int_to_ptr.vmem [resolvable:$true] %s317
          %320 = dma.vmem_to_hbm [thread:$0]  %s318, 16, %s2, [#allocation6]
        $region40: #{tpu_custom_call.1} parent=27 // pred_fallthru
          _
        // Predicated region
        $region41: #{tpu_custom_call.1} parent=27 // pred_check
          %p321 = pneg %p79
        $region42: #{tpu_custom_call.1} parent=27 // pred_check_branch
          %323 = sbr.rel (%p321) target = $region44
        $region43: #{tpu_custom_call.1} parent=27 // pred_region
          %324 = dma.done [#allocation6], 16
        $region44: #{tpu_custom_call.1} parent=27 // pred_fallthru
          _
      $region28: #{tpu_custom_call.1} parent=5 // pred_fallthru
        _
      %p325 = scmp.le.s32.totalorder 2, %s9
      // Predicated region
      $region45: #{tpu_custom_call.1} parent=5 // pred_check
        %p326 = pneg %p325
      $region46: #{tpu_custom_call.1} parent=5 // pred_check_branch
        %328 = sbr.rel (%p326) target = $region48
      $region47: #{tpu_custom_call.1} parent=5 // pred_region
        %s329 = ssub.s32 %s9, 2
      $region48: #{tpu_custom_call.1} parent=5 // pred_fallthru
        _
    $region6: #{tpu_custom_call.1} parent=1 // loop_footer
      %s13 = sadd.s32 1, %s9
    $region7: #{tpu_custom_call.1} parent=1 // loop_footer_branch
      %8 = sbr.rel target = $region3
    $region8: #{tpu_custom_call.1} parent=1 // loop_exit
      _
    %330 = vsyncpa [#allocation6], 1
    %s331 = scalar_lea.sflag [#allocation6], 1
    %332 = vsyncpa %s331, 1

</llo_original>
